<compile_context>
chip_gen: v6e
topology: v6e:2x2x1
jax: 0.10.0
libtpu: 0.0.40
codegen_flags: <defaults>
</compile_context>

<pallas_src>
import jax
import jax.numpy as jnp
from jax.experimental import pallas as pl
from jax.experimental.pallas import tpu as pltpu


# ----------------------------------------------------------------------------
# Kernels
# ----------------------------------------------------------------------------

def _make_lane_kernel(l_in: int, seg_lens):
    """Copy a (1, 1, l_in) lane slab and replicate its prefix segments.

    Output block is (1, 1, l_in + sum(seg_lens)); every store is a static,
    lane-contiguous slice — no sublane-axis work, no concat temporary.
    """
    seg_lens = tuple(int(s) for s in seg_lens)

    def kernel(x_ref, o_ref):
        x = x_ref[...]                              # (1, 1, l_in) in vregs
        o_ref[:, :, 0:l_in] = x                     # identity copy
        off = l_in
        for ln in seg_lens:                         # static unrolled (<= 2)
            o_ref[:, :, off:off + ln] = x[:, :, 0:ln]
            off += ln

    return kernel


def _make_tiled_kernel(c_in: int, eff: int):
    """Copy a (1, c_in, TS) tile into a (1, c_in + eff, TS) tile via direct
    channel-slab stores (no jnp.concatenate, no extra VMEM temporary)."""
    copy_full = min(eff, c_in)        # second copy of leading channels
    rem_extra = max(0, eff - c_in)    # trailing third partial copy (<= c_in)

    def kernel(x_ref, o_ref):
        x = x_ref[...]                                   # (1, c_in, TS)
        o_ref[:, 0:c_in, :] = x
        if copy_full > 0:
            o_ref[:, c_in:c_in + copy_full, :] = x[:, 0:copy_full, :]
        if rem_extra > 0:
            o_ref[:, 2 * c_in:2 * c_in + rem_extra, :] = x[:, 0:rem_extra, :]

    return kernel


# ----------------------------------------------------------------------------
# Tile / VMEM policy helpers
# ----------------------------------------------------------------------------

def _vmem_capacity_bytes() -> int:
    try:
        return int(pltpu.get_tpu_info().vmem_capacity_bytes)
    except Exception:
        return 64 << 20  # conservative (v7x-sized) default


def _vmem_policy():
    """(vmem_limit_bytes, per_output_block_budget_bytes) by TPU generation."""
    cap = _vmem_capacity_bytes()
    if cap >= (96 << 20):          # v5e / v6e: 128 MiB physical VMEM
        return 64 << 20, 6 << 20
    return 32 << 20, 3 << 20       # v7x: 64 MiB physical VMEM


def _spatial_tile(hw: int, c_out: int, itemsize: int, budget_bytes: int,
                  want_multi: bool) -> int:
    """Largest multiple-of-128 divisor of hw whose output block fits the
    budget; capped at hw//2 when `want_multi` so the grid has >= 2 steps."""
    if hw % 128 != 0:
        # TODO(synk): pad HW to a multiple of 128 for very large non-aligned
        # spatial dims; a full-dim block is always legal but may exceed the
        # VMEM budget in that (untested) regime.
        return hw
    cap = hw // 2 if (want_multi and hw >= 256) else hw
    best = None
    t = 128
    while t <= hw:
        if hw % t == 0 and t <= cap and c_out * t * itemsize <= budget_bytes:
            best = t
        t += 128
    return best if best is not None else 128


# ----------------------------------------------------------------------------
# Forward paths
# ----------------------------------------------------------------------------

def _forward_lane(x1, c_in, eff, c_out, hw, vmem_limit):
    """Lane-flattened path: one grid step per batch row, lane-dense stores."""
    n, _, h, w = x1.shape
    l_in = c_in * hw
    l_out = c_out * hw
    seg_lens = []
    if min(eff, c_in) > 0:
        seg_lens.append(min(eff, c_in) * hw)
    if eff > c_in:
        seg_lens.append((eff - c_in) * hw)

    x_flat = x1.reshape(n, 1, l_in)           # free metadata reshape

    out = pl.pallas_call(
        _make_lane_kernel(l_in, seg_lens),
        out_shape=jax.ShapeDtypeStruct((n, 1, l_out), x1.dtype),
        grid=(n,),
        in_specs=[pl.BlockSpec((1, 1, l_in), lambda b: (b, 0, 0))],
        out_specs=pl.BlockSpec((1, 1, l_out), lambda b: (b, 0, 0)),
        compiler_params=pltpu.CompilerParams(
            dimension_semantics=("parallel",),
            vmem_limit_bytes=vmem_limit,
        ),
    )(x_flat)
    return out.reshape(n, c_out, h, w)


def _forward_tiled(x1, c_in, eff, c_out, hw, itemsize, block_budget,
                   vmem_limit):
    """Spatially-tiled path for large per-batch slabs."""
    n, _, h, w = x1.shape
    ts = _spatial_tile(hw, c_out, itemsize, block_budget, want_multi=(n == 1))
    x3 = x1.reshape(n, c_in, hw)              # free metadata reshape

    out3 = pl.pallas_call(
        _make_tiled_kernel(c_in, eff),
        out_shape=jax.ShapeDtypeStruct((n, c_out, hw), x1.dtype),
        grid=(n, hw // ts),
        in_specs=[pl.BlockSpec((1, c_in, ts), lambda b, t: (b, 0, t))],
        out_specs=pl.BlockSpec((1, c_out, ts), lambda b, t: (b, 0, t)),
        compiler_params=pltpu.CompilerParams(
            dimension_semantics=("parallel", "parallel"),
            vmem_limit_bytes=vmem_limit,
        ),
    )(x3)
    return out3.reshape(n, c_out, h, w)


def _reference(x1: jax.Array, size: int) -> jax.Array:
    """Pure-JAX reference with exact torch slicing semantics."""
    x2 = jnp.concatenate([x1, x1], axis=1)
    x4 = x2[:, 0:size]                         # numpy/torch slice semantics
    return jnp.concatenate([x1, x4], axis=1)


def model_forward(x1: jax.Array, size: int, *,
                  small_fallback_bytes: int = 1 << 20,
                  path: str = "auto") -> jax.Array:
    """Equivalent of Model(size).forward(x1) for NCHW x1."""
    n, c, h, w = x1.shape
    two_c = 2 * c
    s = int(size)
    # Python/torch slice semantics for x2[:, 0:size] with 2*C channels.
    eff = max(0, two_c + s) if s < 0 else min(s, two_c)
    c_out = c + eff
    hw = h * w
    itemsize = jnp.dtype(x1.dtype).itemsize
    out_bytes = n * c_out * hw * itemsize

    # Tiny problems: pallas_call dispatch overhead dominates; let XLA fuse it.
    if path == "auto" and out_bytes <= small_fallback_bytes:
        return _reference(x1, s)

    vmem_limit, block_budget = _vmem_policy()

    lane_ok = c_out * hw * itemsize <= block_budget
    if path == "lane" or (path == "auto" and lane_ok):
        return _forward_lane(x1, c, eff, c_out, hw, vmem_limit)
    return _forward_tiled(x1, c, eff, c_out, hw, itemsize, block_budget,
                          vmem_limit)


# ----------------------------------------------------------------------------
# Test
# ----------------------------------------------------------------------------

if __name__ == "__main__":
    key = jax.random.PRNGKey(0)
    N, C, H, W = 2, 4, 16, 16
    size = 6  # module hyper-parameter

    x1 = jax.random.normal(key, (N, C, H, W), dtype=jnp.float32)
    ref = _reference(x1, size)
    expected_shape = (N, C + min(size, 2 * C), H, W)

    # 1) Lane-flattened Pallas path (forced past the small-problem fallback).
    out_lane = jax.block_until_ready(
        model_forward(x1, size, small_fallback_bytes=0, path="lane"))
    assert out_lane.shape == expected_shape, out_lane.shape
    assert jnp.array_equal(out_lane, ref), "lane-path mismatch vs reference"

    # 2) Spatially-tiled Pallas path (large-shape fallback), same small input.
    out_tiled = jax.block_until_ready(
        model_forward(x1, size, small_fallback_bytes=0, path="tiled"))
    assert out_tiled.shape == expected_shape, out_tiled.shape
    assert jnp.array_equal(out_tiled, ref), "tiled-path mismatch vs reference"

    # 3) Default auto path (tiny problem -> XLA fallback) stays consistent.
    out_auto = jax.block_until_ready(model_forward(x1, size))
    assert jnp.array_equal(out_auto, ref), "auto-path mismatch vs reference"

    print("KERNEL_OK")
</pallas_src>

<mosaic_0001>
module attributes {stable_mosaic.version = 11 : i64} {
  func.func @kernel(%arg0: i32, %arg1: memref<1x1x1024xf32, #tpu.memory_space<vmem>>, %arg2: memref<1x1x2560xf32, #tpu.memory_space<vmem>>) attributes {dimension_semantics = [#tpu.dimension_semantics<parallel>], iteration_bounds = array<i64: 2>, scalar_prefetch = 0 : i64, scratch_operands = 0 : i64, tpu.core_type = #tpu.core_type<tc>, window_params = [{transform_indices = @transform_0, window_bounds = array<i64: 1, 1, 1024>}, {transform_indices = @transform_1, window_bounds = array<i64: 1, 1, 2560>}]} {
    %c0 = arith.constant 0 : index
    %c0_0 = arith.constant 0 : index
    %c0_1 = arith.constant 0 : index
    %0 = vector.load %arg1[%c0, %c0_0, %c0_1] : memref<1x1x1024xf32, #tpu.memory_space<vmem>>, vector<1x1x1024xf32>
    %c0_2 = arith.constant 0 : index
    %c0_3 = arith.constant 0 : index
    %c0_4 = arith.constant 0 : index
    %1 = vector.load %arg2[%c0_2, %c0_3, %c0_4] : memref<1x1x2560xf32, #tpu.memory_space<vmem>>, vector<1x1x1024xf32>
    tpu.vector_store %arg2[%c0_2, %c0_3, %c0_4], %0 {strides = array<i32>} : memref<1x1x2560xf32, #tpu.memory_space<vmem>>, vector<1x1x1024xf32>,
    %c0_5 = arith.constant 0 : index
    %c0_6 = arith.constant 0 : index
    %c1024 = arith.constant 1024 : index
    %2 = vector.load %arg2[%c0_5, %c0_6, %c1024] : memref<1x1x2560xf32, #tpu.memory_space<vmem>>, vector<1x1x1024xf32>
    tpu.vector_store %arg2[%c0_5, %c0_6, %c1024], %0 {strides = array<i32>} : memref<1x1x2560xf32, #tpu.memory_space<vmem>>, vector<1x1x1024xf32>,
    %3 = vector.extract_strided_slice %0 {offsets = [0, 0, 0], sizes = [1, 1, 512], strides = [1, 1, 1]} : vector<1x1x1024xf32> to vector<1x1x512xf32>
    %c0_7 = arith.constant 0 : index
    %c0_8 = arith.constant 0 : index
    %c2048 = arith.constant 2048 : index
    %4 = vector.load %arg2[%c0_7, %c0_8, %c2048] : memref<1x1x2560xf32, #tpu.memory_space<vmem>>, vector<1x1x512xf32>
    tpu.vector_store %arg2[%c0_7, %c0_8, %c2048], %3 {strides = array<i32>} : memref<1x1x2560xf32, #tpu.memory_space<vmem>>, vector<1x1x512xf32>,
    return
  }
  func.func @transform_0(%arg0: i32) -> (i32, i32, i32) {
    %c0_i32 = arith.constant 0 : i32
    %c0_i32_0 = arith.constant 0 : i32
    %c0_i32_1 = arith.constant 0 : i32
    return %arg0, %c0_i32, %c0_i32_0 : i32, i32, i32
  }
  func.func @transform_1(%arg0: i32) -> (i32, i32, i32) {
    %c0_i32 = arith.constant 0 : i32
    %c0_i32_0 = arith.constant 0 : i32
    %c0_i32_1 = arith.constant 0 : i32
    return %arg0, %c0_i32, %c0_i32_0 : i32, i32, i32
  }
}

</mosaic_0001>

<llo_original>
// kernel: tpu_custom_call.1
$region0: #{tpu_custom_call.1}
  #allocation0 [shape = 'u32[]', space=smem, size = 0x4, offset = 0x4, fixed_abs, tag = 'smem constant byte address 0x4 - core index']
  #allocation1 [shape = 'u32[144,128]{1,0:T(1,128)}', space=vmem, size = 0x12000, scoped, tag = 'internal scratch']
  %s0 = inlined_call_operand.hbm [shape: f32[2,1,1024], index: 0, kind: input, shape index: {}]
  %s1 = inlined_call_operand.hbm [shape: f32[2,1,2560], index: 1, kind: output, shape index: {}]
  %s2 = sld [smem:[#allocation0]]
  $region41: #{tpu_custom_call.1} parent=0
    _
  %s4 = ssub.s32 1, %s2
  %s5 = scalar_select 0, %s4, %s2
  $region1: #{tpu_custom_call.1} parent=0
    #allocation2 [shape = 'u8[8192]{0}', space=vmem, size = 0x2000, scoped, tag = 'input window, operand 0']
    #allocation3 [shape = 's32[2]{0}', space=sflag, size = 0x8, scoped, tag = 'scoped memory for tpu_custom_call.1']
    #allocation4 [shape = 's32[2]{0}', space=sflag, size = 0x8, scoped, tag = 'scoped memory for tpu_custom_call.1']
    #allocation5 [shape = 'u8[20480]{0}', space=vmem, size = 0x5000, scoped, tag = 'output window, operand 0']
    %6 = vsyncpa [#allocation3], 0
    %s7 = scalar_lea.sflag [#allocation3], 1
    %8 = vsyncpa %s7, 0
    %9 = vsyncpa [#allocation4], 0
    %s10 = scalar_lea.sflag [#allocation4], 1
    %11 = vsyncpa %s10, 0
    loop: start=0, step=1, limit=4
    $region2: #{tpu_custom_call.1} parent=1 // loop_pre_header
      _
    $region3: #{tpu_custom_call.1} parent=1 // loop_header
      %s13 = sphi 0, %s17
      %p14 = scmp.ge.s32.totalorder %s13, 4
      %s23 = sphi 0, %s25
      %s26 = sphi 0, %s23
      %s27 = sphi 0, %s26
      %s43 = sphi 0, %s27
      %s49 = sphi 0, %s51
      %s52 = sphi 0, %s49
      %s53 = sphi 0, %s52
      %s69 = sphi 0, %s53
    $region4: #{tpu_custom_call.1} parent=1 // loop_header_branch
      %16 = sbr.rel (%p14) target = $region8
    $region5: #{tpu_custom_call.1} parent=1 // loop_body
      %s18 = ssub.s32 %s13, 1
      %s19 = ssub.s32 %s13, 2
      %s20 = sadd.s32 %s13, 1
      %s21 = ssub.s32 %s13, %s20
      %p22 = scmp.eq.s32.totalorder %s21, 0
      %s24 = sadd.s32 %s23, 1
      %s25 = scalar_select %p22, %s23, %s24
      %p28 = pneg %p22
      %p29 = scmp.eq.s32.totalorder %s13, 1
      %p30 = por %p28, %p29
      %p31 = scmp.ne.s32.totalorder %s23, %s26
      %p32 = scmp.eq.s32.totalorder %s13, 0
      %p33 = por %p31, %p32
      %p34 = scmp.ne.s32.totalorder %s23, %s26
      %p35 = scmp.eq.s32.totalorder %s18, 1
      %p36 = por %p34, %p35
      %p37 = scmp.ne.s32.totalorder %s26, %s27
      %p38 = scmp.eq.s32.totalorder %s18, 0
      %p39 = por %p37, %p38
      %p40 = scmp.ne.s32.totalorder %s26, %s27
      %p41 = scmp.eq.s32.totalorder %s19, 1
      %p42 = por %p40, %p41
      %p44 = scmp.ne.s32.totalorder %s27, %s43
      %p45 = scmp.eq.s32.totalorder %s19, 0
      %p46 = por %p44, %p45
      %s47 = ssub.s32 %s13, %s20
      %p48 = scmp.eq.s32.totalorder %s47, 0
      %s50 = sadd.s32 %s49, 1
      %s51 = scalar_select %p48, %s49, %s50
      %p54 = pneg %p48
      %p55 = scmp.eq.s32.totalorder %s13, 1
      %p56 = por %p54, %p55
      %p57 = scmp.ne.s32.totalorder %s49, %s52
      %p58 = scmp.eq.s32.totalorder %s13, 0
      %p59 = por %p57, %p58
      %p60 = scmp.ne.s32.totalorder %s49, %s52
      %p61 = scmp.eq.s32.totalorder %s18, 1
      %p62 = por %p60, %p61
      %p63 = scmp.ne.s32.totalorder %s52, %s53
      %p64 = scmp.eq.s32.totalorder %s18, 0
      %p65 = por %p63, %p64
      %p66 = scmp.ne.s32.totalorder %s52, %s53
      %p67 = scmp.eq.s32.totalorder %s19, 1
      %p68 = por %p66, %p67
      %p70 = scmp.ne.s32.totalorder %s53, %s69
      %p71 = scmp.eq.s32.totalorder %s19, 0
      %p72 = por %p70, %p71
      %p73 = scmp.le.s32.totalorder 1, %s13
      %p74 = scmp.lt.s32.totalorder %s13, 3
      %p75 = pnand %p73, %p74
      %p76 = pneg %p75
      // Predicated region
      $region9: #{tpu_custom_call.1} parent=5 // pred_check
        _
      $region10: #{tpu_custom_call.1} parent=5 // pred_check_branch
        %78 = sbr.rel (%p75) target = $region12
      $region11: #{tpu_custom_call.1} parent=5 // pred_region
        %s79 = ssub.s32 %s13, 1
      $region12: #{tpu_custom_call.1} parent=5 // pred_fallthru
        _
      %p80 = scmp.lt.s32.totalorder %s13, 2
      // Predicated region
      $region13: #{tpu_custom_call.1} parent=5 // pred_check
        %p81 = pneg %p80
      $region14: #{tpu_custom_call.1} parent=5 // pred_check_branch
        %83 = sbr.rel (%p81) target = $region16
      $region15: #{tpu_custom_call.1} parent=5 // pred_region
        // Predicated region
        $region17: #{tpu_custom_call.1} parent=15 // pred_check
          %p84 = pneg %p33
        $region18: #{tpu_custom_call.1} parent=15 // pred_check_branch
          %86 = sbr.rel (%p84) target = $region20
        $region19: #{tpu_custom_call.1} parent=15 // pred_region
          %s87 = sand.u32 %s23, 1
          %s88 = scalar_lea.sflag [#allocation3], %s87
          %s89 = sand.u32 %s23, 1
          %s90 = smul.addr %s89, 8
          %s91 = scalar_lea.vmem [#allocation2], %s90
          %s93 = ssub.s32 128, 128
          %94 = vsyncadd %s88, %s93
          %s95 = smul.addr %s13, 8
          %s96 = smul.addr %s95, 16
          %s97 = scalar_lea.hbm %s0, %s96
          %s99 = sshll.u32 %s91, 4
          %s100 = int_to_ptr.vmem [resolvable:$true] %s99
          %102 = dma.hbm_to_vmem [thread:$0]  %s97, 128, %s100, %s88
        $region20: #{tpu_custom_call.1} parent=15 // pred_fallthru
          _
      $region16: #{tpu_custom_call.1} parent=5 // pred_fallthru
        _
      %p103 = scmp.le.s32.totalorder 1, %s13
      %p104 = scmp.lt.s32.totalorder %s13, 3
      %p105 = pnand %p103, %p104
      %p106 = pneg %p105
      // Predicated region
      $region21: #{tpu_custom_call.1} parent=5 // pred_check
        _
      $region22: #{tpu_custom_call.1} parent=5 // pred_check_branch
        %108 = sbr.rel (%p105) target = $region24
      $region23: #{tpu_custom_call.1} parent=5 // pred_region
        %s109 = ssub.s32 %s13, 1
        %s110 = sand.u32 %s26, 1
        %s111 = scalar_lea.sflag [#allocation3], %s110
        %s112 = sand.u32 %s26, 1
        %s113 = smul.addr %s112, 8
        %s114 = scalar_lea.vmem [#allocation2], %s113
        // Predicated region
        $region25: #{tpu_custom_call.1} parent=23 // pred_check
          %p115 = pneg %p39
        $region26: #{tpu_custom_call.1} parent=23 // pred_check_branch
          %117 = sbr.rel (%p115) target = $region28
        $region27: #{tpu_custom_call.1} parent=23 // pred_region
          %118 = dma.done %s111, 128
        $region28: #{tpu_custom_call.1} parent=23 // pred_fallthru
          _
        %s119 = sand.u32 %s26, 1
        %s120 = scalar_lea.sflag [#allocation3], %s119
        %s121 = sand.u32 %s26, 1
        %s122 = smul.addr %s121, 8
        %s123 = scalar_lea.vmem [#allocation2], %s122
        %p124 = pneg %p39
        %p125 = pneg %p36
        %p126 = pneg %p65
        %p127 = pneg %p62
        %s128 = sand.u32 %s52, 1
        %s129 = scalar_lea.sflag [#allocation4], %s128
        %s130 = sand.u32 %s52, 1
        %s131 = smul.addr %s130, 20
        %s132 = scalar_lea.vmem [#allocation5], %s131
        %v133 = vld [vmem:[%s114] sm:$0xff]
        %134 = vst [vmem:[%s132] sm:$0xff] %v133
        %135 = vst [vmem:[%s132 + $0x8] sm:$0xff] %v133
        %v136 = vlaneseq
        %vm137 = vcmp.ge.s32.totalorder %v136, 0
        %vm138 = vcmp.lt.s32.totalorder %v136, 512
        %vm139 = vmand %vm137, %vm138
        %140 = vst.msk [vmem:[%s132 + $0x10] sm:$0xf] %vm139, %v133
        %s141 = sand.u32 %s52, 1
        %s142 = scalar_lea.sflag [#allocation4], %s141
        %s143 = sand.u32 %s52, 1
        %s144 = smul.addr %s143, 20
        %s145 = scalar_lea.vmem [#allocation5], %s144
        // Predicated region
        $region29: #{tpu_custom_call.1} parent=23 // pred_check
          %p146 = pneg %p62
        $region30: #{tpu_custom_call.1} parent=23 // pred_check_branch
          %148 = sbr.rel (%p146) target = $region32
        $region31: #{tpu_custom_call.1} parent=23 // pred_region
          %s150 = ssub.s32 320, 320
          %151 = vsyncadd %s142, %s150
          %s152 = smul.addr %s18, 20
          %s153 = smul.addr %s152, 16
          %s154 = scalar_lea.hbm %s1, %s153
          %s156 = sshll.u32 %s145, 4
          %s157 = int_to_ptr.vmem [resolvable:$true] %s156
          %159 = dma.vmem_to_hbm [thread:$0]  %s157, 320, %s154, %s142
        $region32: #{tpu_custom_call.1} parent=23 // pred_fallthru
          _
      $region24: #{tpu_custom_call.1} parent=5 // pred_fallthru
        _
      %p160 = scmp.le.s32.totalorder 2, %s13
      // Predicated region
      $region33: #{tpu_custom_call.1} parent=5 // pred_check
        %p161 = pneg %p160
      $region34: #{tpu_custom_call.1} parent=5 // pred_check_branch
        %163 = sbr.rel (%p161) target = $region36
      $region35: #{tpu_custom_call.1} parent=5 // pred_region
        %s164 = ssub.s32 %s13, 2
        // Predicated region
        $region37: #{tpu_custom_call.1} parent=35 // pred_check
          %p165 = pneg %p68
        $region38: #{tpu_custom_call.1} parent=35 // pred_check_branch
          %167 = sbr.rel (%p165) target = $region40
        $region39: #{tpu_custom_call.1} parent=35 // pred_region
          %s168 = sand.u32 %s53, 1
          %s169 = scalar_lea.sflag [#allocation4], %s168
          %s170 = sand.u32 %s53, 1
          %s171 = smul.addr %s170, 20
          %s172 = scalar_lea.vmem [#allocation5], %s171
          %173 = dma.done %s169, 320
        $region40: #{tpu_custom_call.1} parent=35 // pred_fallthru
          _
      $region36: #{tpu_custom_call.1} parent=5 // pred_fallthru
        _
    $region6: #{tpu_custom_call.1} parent=1 // loop_footer
      %s17 = sadd.s32 1, %s13
    $region7: #{tpu_custom_call.1} parent=1 // loop_footer_branch
      %12 = sbr.rel target = $region3
    $region8: #{tpu_custom_call.1} parent=1 // loop_exit
      _
    %174 = vsyncpa [#allocation3], 1
    %s175 = scalar_lea.sflag [#allocation3], 1
    %176 = vsyncpa %s175, 1
    %177 = vsyncpa [#allocation4], 1
    %s178 = scalar_lea.sflag [#allocation4], 1
    %179 = vsyncpa %s178, 1

</llo_original>
